<compile_context>
chip_gen: v5e
topology: v5e:2x2
jax: 0.10.0
libtpu: 0.0.40
codegen_flags: <defaults>
</compile_context>

<pallas_src>
import functools

import jax
import jax.numpy as jnp
from jax import lax
from jax.experimental import pallas as pl
from jax.experimental.pallas import tpu as pltpu


def _hash_u32(x):
    """lowbias32-style integer mixer (pure jnp -> portable to Mosaic + interpret)."""
    x = x ^ (x >> 16)
    x = x * jnp.uint32(0x7FEB352D)
    x = x ^ (x >> 15)
    x = x * jnp.uint32(0x846CA68B)
    x = x ^ (x >> 16)
    return x


def _uniform01(u32):
    """uint32 bits -> float32 uniform in [0, 1) using the top 23 bits."""
    return (u32 >> 9).astype(jnp.int32).astype(jnp.float32) * (1.0 / 8388608.0)


def _bnode_embedding_kernel(seed_ref, idx_ref, table_ref, out_ref, *,
                            tn, v, d, p, apply_dropout):
    i = pl.program_id(0)

    # ---- vectorized embedding gather: one-hot matmul on the MXU ----
    idx = idx_ref[...]                                           # (tn, 1) int32
    cols = lax.broadcasted_iota(jnp.int32, (tn, v), 1)           # (tn, V)
    one_hot = (cols == idx).astype(jnp.float32)                  # (tn, V)
    emb = jnp.dot(one_hot, table_ref[...],
                  preferred_element_type=jnp.float32,
                  precision=lax.Precision.HIGHEST)               # (tn, D) f32

    # ---- dropout path (training only; p is a static Python float) ----
    if apply_dropout:
        half = p / 2.0
        scale2 = (1.0 / (1.0 - half)) ** 2
        seed_u = seed_ref[0].astype(jnp.uint32)
        row0 = i * tn                                            # int32 scalar

        # Dropout2d(p/2): one keep/drop decision per (b, s) embedding row.
        row_ids = lax.broadcasted_iota(jnp.int32, (tn, 1), 0) + row0
        u_row = _uniform01(_hash_u32(
            row_ids.astype(jnp.uint32) * jnp.uint32(0x9E3779B9)
            + seed_u * jnp.uint32(0x85EBCA6B) + jnp.uint32(1)))  # (tn, 1)

        # Dropout(p/2): independent per-element decision.
        elem_ids = ((lax.broadcasted_iota(jnp.int32, (tn, d), 0) + row0) * d
                    + lax.broadcasted_iota(jnp.int32, (tn, d), 1))
        u_elem = _uniform01(_hash_u32(
            elem_ids.astype(jnp.uint32) * jnp.uint32(0x9E3779B9)
            + seed_u * jnp.uint32(0x85EBCA6B) + jnp.uint32(2)))  # (tn, d)

        keep = (u_elem >= half) & (jnp.broadcast_to(u_row, (tn, d)) >= half)
        emb = jnp.where(keep, emb * scale2, 0.0)                 # 1 mul + 1 select

    out_ref[...] = emb                                           # single store per tile


def bnode_embedding(x, embedding, dropout_p, seed=0, training=True, tn=256):
    """Forward pass of BnodeEmbedding.

    x:         int (B, S) token indices
    embedding: float32 (V, D) pretrained embedding table
    returns:   float32 (B, S, D)
    """
    B, S = x.shape
    V, D = embedding.shape
    N = B * S

    # Tile size: multiple of 8 sublanes, clamped to the (padded) token count.
    tn = max(8, (min(int(tn), max(N, 8)) // 8) * 8)
    N_pad = ((N + tn - 1) // tn) * tn

    idx = x.reshape(N).astype(jnp.int32)
    if N_pad != N:
        idx = jnp.concatenate([idx, jnp.zeros((N_pad - N,), jnp.int32)])
    idx = idx.reshape(N_pad, 1)

    seed_arr = jnp.array([seed], dtype=jnp.int32)
    apply_dropout = bool(training) and float(dropout_p) > 0.0

    kernel = functools.partial(
        _bnode_embedding_kernel,
        tn=tn, v=V, d=D, p=float(dropout_p), apply_dropout=apply_dropout,
    )

    out = pl.pallas_call(
        kernel,
        out_shape=jax.ShapeDtypeStruct((N_pad, D), jnp.float32),
        grid_spec=pltpu.PrefetchScalarGridSpec(
            num_scalar_prefetch=1,                               # seed -> SMEM
            grid=(N_pad // tn,),
            in_specs=[
                # per-tile token indices, VMEM
                pl.BlockSpec((tn, 1), lambda i, seed: (i, 0)),
                # full embedding table, VMEM-resident (constant index_map -> fetched once)
                pl.BlockSpec((V, D), lambda i, seed: (0, 0)),
            ],
            out_specs=pl.BlockSpec((tn, D), lambda i, seed: (i, 0)),
        ),
        compiler_params=pltpu.CompilerParams(
            # Independent tiles -> shard the grid across TensorCores (v7x megacore).
            dimension_semantics=("parallel",),
        ),
    )(seed_arr, idx, embedding)

    return out[:N].reshape(B, S, D)


if __name__ == "__main__":
    key = jax.random.PRNGKey(0)
    k_emb, k_idx = jax.random.split(key)

    V, D = 50, 32          # vocab size, embedding dim
    B, S = 2, 8            # batch, sequence length

    embedding = jax.random.normal(k_emb, (V, D), dtype=jnp.float32)
    x = jax.random.randint(k_idx, (B, S), 0, V, dtype=jnp.int32)

    ref = embedding[x]

    # p == 0 (or eval): pure embedding lookup -> must match reference.
    out_eval = bnode_embedding(x, embedding, dropout_p=0.0, seed=0)
    jax.block_until_ready(out_eval)
    assert out_eval.shape == (B, S, D)
    assert jnp.allclose(out_eval, ref, rtol=1e-6, atol=1e-6), "embedding lookup mismatch"

    # p > 0, training: every output element must be either 0 (dropped) or
    # embedding * (1/(1-p/2))^2 (kept through both dropout layers).
    p = 0.3
    out_train = bnode_embedding(x, embedding, dropout_p=p, seed=42, training=True)
    jax.block_until_ready(out_train)
    assert out_train.shape == (B, S, D)
    scale2 = (1.0 / (1.0 - p / 2.0)) ** 2
    ok = (jnp.abs(out_train) <= 1e-6) | (jnp.abs(out_train - ref * scale2) <= 1e-4)
    assert bool(jnp.all(ok)), "dropout output not in {0, emb*scale^2}"

    print("KERNEL_OK")
</pallas_src>

<mosaic_0001>
module attributes {stable_mosaic.version = 11 : i64} {
  func.func @_bnode_embedding_kernel(%arg0: i32, %arg1: memref<1xi32, #tpu.memory_space<smem>>, %arg2: memref<16x1xi32, #tpu.memory_space<vmem>>, %arg3: memref<50x32xf32, #tpu.memory_space<vmem>>, %arg4: memref<16x32xf32, #tpu.memory_space<vmem>>) attributes {dimension_semantics = [#tpu.dimension_semantics<parallel>], iteration_bounds = array<i64: 1>, scalar_prefetch = 1 : i64, scratch_operands = 0 : i64, tpu.core_type = #tpu.core_type<tc>, window_params = [{transform_indices = @transform_0, window_bounds = array<i64: 16, 1>}, {pipeline_mode = #tpu.pipeline_mode<synchronous>, transform_indices = @transform_1, window_bounds = array<i64: 50, 32>}, {transform_indices = @transform_2, window_bounds = array<i64: 16, 32>}]} {
    %c0 = arith.constant 0 : index
    %c0_0 = arith.constant 0 : index
    %0 = vector.load %arg2[%c0, %c0_0] : memref<16x1xi32, #tpu.memory_space<vmem>>, vector<16x1xi32>
    %1 = tpu.iota {dimensions = array<i32: 1>} : vector<16x50xi32>
    %2 = vector.broadcast %0 : vector<16x1xi32> to vector<16x50xi32>
    %3 = arith.cmpi eq, %1, %2 : vector<16x50xi32>
    %4 = arith.extui %3 : vector<16x50xi1> to vector<16x50xi32>
    %5 = arith.sitofp %4 : vector<16x50xi32> to vector<16x50xf32>
    %c0_1 = arith.constant 0 : index
    %c0_2 = arith.constant 0 : index
    %6 = vector.load %arg3[%c0_1, %c0_2] : memref<50x32xf32, #tpu.memory_space<vmem>>, vector<50x32xf32>
    %cst = arith.constant dense<0.000000e+00> : vector<16x32xf32>
    %7 = tpu.matmul %5, %6, %cst {dimension_numbers = #tpu.dot_dimension_numbers<[1], [0], [0], [1], [0, 0, 1, 1], [], []>, precision = #tpu.contract_precision<fp32>} : vector<16x50xf32>, vector<50x32xf32>, vector<16x32xf32> -> vector<16x32xf32>
    %c0_3 = arith.constant 0 : index
    %c0_4 = arith.constant 0 : index
    %8 = vector.load %arg4[%c0_3, %c0_4] : memref<16x32xf32, #tpu.memory_space<vmem>>, vector<16x32xf32>
    tpu.vector_store %arg4[%c0_3, %c0_4], %7 {strides = array<i32>} : memref<16x32xf32, #tpu.memory_space<vmem>>, vector<16x32xf32>,
    return
  }
  func.func @transform_0(%arg0: i32, %arg1: memref<1xi32, #tpu.memory_space<smem>>) -> (i32, i32) {
    %c0_i32 = arith.constant 0 : i32
    %c0_i32_0 = arith.constant 0 : i32
    return %arg0, %c0_i32 : i32, i32
  }
  func.func @transform_1(%arg0: i32, %arg1: memref<1xi32, #tpu.memory_space<smem>>) -> (i32, i32) {
    %c0_i32 = arith.constant 0 : i32
    %c0_i32_0 = arith.constant 0 : i32
    %c0_i32_1 = arith.constant 0 : i32
    return %c0_i32, %c0_i32_0 : i32, i32
  }
  func.func @transform_2(%arg0: i32, %arg1: memref<1xi32, #tpu.memory_space<smem>>) -> (i32, i32) {
    %c0_i32 = arith.constant 0 : i32
    %c0_i32_0 = arith.constant 0 : i32
    return %arg0, %c0_i32 : i32, i32
  }
}

</mosaic_0001>

<llo_original>
// kernel: tpu_custom_call.1
$region0: #{tpu_custom_call.1}
  #allocation0 [shape = 'u32[]', space=smem, size = 0x4, offset = 0x4, fixed_abs, tag = 'smem constant byte address 0x4 - core index']
  #allocation1 [shape = 'u32[72,128]{1,0:T(1,128)}', space=vmem, size = 0x9000, scoped, tag = 'internal scratch']
  #allocation2 [shape = 's32[1]{0}', space=sflag, size = 0x4, scoped, tag = 'scoped memory for tpu_custom_call.1']
  #allocation3 [shape = 's32[1]{0:T(128)S(6)}', space=smem, size = 0x200, scoped, tag = 'prefetched SMEM operand 0']
  %s0 = inlined_call_operand.<no memory space> [shape: s32[1], index: 0, kind: input, shape index: {}]
  %s1 = inlined_call_operand.vmem [shape: s32[16,1], index: 1, kind: input, shape index: {}]
  %s2 = inlined_call_operand.vmem [shape: f32[50,32], index: 2, kind: input, shape index: {}]
  %s3 = inlined_call_operand.hbm [shape: f32[16,32], index: 3, kind: output, shape index: {}]
  %s4 = sld [smem:[#allocation0]]
  $region18: #{tpu_custom_call.1} parent=0
    _
  %s6 = ssub.s32 1, %s4
  %s7 = scalar_select 0, %s6, %s4
  %8 = sst [smem:[#allocation3]] %s0
  $region1: #{tpu_custom_call.1} parent=0
    #allocation4 [shape = 'u8[8192]{0}', space=vmem, size = 0x2000, scoped, tag = 'output window, operand 0, single buffered']
    #allocation5 [shape = 's32[1]{0}', space=sflag, size = 0x4, scoped, tag = 'scoped memory for tpu_custom_call.1']
    %9 = vsyncpa [#allocation5], 0
    // Predicated region
    $region2: #{tpu_custom_call.1} parent=1 // pred_check
      _
    $region3: #{tpu_custom_call.1} parent=1 // pred_check_branch
      %11 = sbr.rel (0) target = $region5
    $region4: #{tpu_custom_call.1} parent=1 // pred_region
      _
    $region5: #{tpu_custom_call.1} parent=1 // pred_fallthru
      _
    // Predicated region
    $region6: #{tpu_custom_call.1} parent=1 // pred_check
      _
    $region7: #{tpu_custom_call.1} parent=1 // pred_check_branch
      %13 = sbr.rel (0) target = $region9
    $region8: #{tpu_custom_call.1} parent=1 // pred_region
      _
    $region9: #{tpu_custom_call.1} parent=1 // pred_fallthru
      _
    %v14 = vld [vmem:[%s1] sm:$0xff]
    %v15 = vld [vmem:[%s1 + $0x8] sm:$0xff]
    %v16 = vlaneseq
    %v17 = vand.u32 %v16, 127
    %18 = vset.pattern.permute.xlu0 0
    %19 = vperm.xlu0 %18, %v14
    %v20 = vpop.permute.xlu0 %19
    %21 = vset.pattern.permute.xlu0 0
    %22 = vperm.xlu0 %21, %v15
    %v23 = vpop.permute.xlu0 %22
    %vm24 = vcmp.eq.s32.totalorder %v17, %v20
    %vm25 = vcmp.eq.s32.totalorder %v17, %v23
    %v26 = vsel %vm24, 1, 0
    %v27 = vsel %vm25, 1, 0
    %v28 = vcvt.s32.f32 %v26
    %v29 = vcvt.s32.f32 %v27
    %v30 = vld [vmem:[%s2] sm:$0xff]
    %v31 = vld [vmem:[%s2 + $0x8] sm:$0xff]
    %v32 = vld [vmem:[%s2 + $0x10] sm:$0xff]
    %v33 = vld [vmem:[%s2 + $0x18] sm:$0xff]
    %v34 = vld [vmem:[%s2 + $0x20] sm:$0xff]
    %v35 = vld [vmem:[%s2 + $0x28] sm:$0xff]
    %v36 = vld [vmem:[%s2 + $0x30] sm:$0x3]
    %vm37 = vcmask 408576
    %v39 = vsel %vm37, %v28, 0
    %v42 = vsel %vm37, %v29, 0
    %vm44 = vcmask 1041408
    %v46 = vsel %vm44, %v36, 0
    %48 = vmatpush.msra.mxu0 0.0
    %49 = vmatpush.msra.mxu0 0.0
    %50 = vmatpush.msra.mxu0 0.0
    %51 = vmatpush.msra.mxu0 0.0
    %52 = vmatpush.msra.mxu0 0.0
    %53 = vmatpush.msra.mxu0 0.0
    %54 = vmatpush.msra.mxu0 0.0
    %55 = vmatpush.msra.mxu0 0.0
    %56 = vmatpush.msra.mxu0 0.0
    %v57 = vand.u32 %v46, 4294901760
    %58 = vmatpush.msra.mxu0 %v57
    %v59 = vand.u32 %v35, 4294901760
    %60 = vmatpush.msra.mxu0 %v59
    %v61 = vand.u32 %v34, 4294901760
    %62 = vmatpush.msra.mxu0 %v61
    %v63 = vand.u32 %v33, 4294901760
    %64 = vmatpush.msra.mxu0 %v63
    %v65 = vand.u32 %v32, 4294901760
    %66 = vmatpush.msra.mxu0 %v65
    %v67 = vand.u32 %v31, 4294901760
    %68 = vmatpush.msra.mxu0 %v67
    %v69 = vand.u32 %v30, 4294901760
    %70 = vmatpush.msra.mxu0 %v69
    %v71 = vand.u32 %v39, 4294901760
    %v72 = vsub.f32 %v39, %v71
    %v73 = vand.u32 %v72, 4294901760
    %v74 = vsub.f32 %v72, %v73
    %v75 = vand.u32 %v74, 4294901760
    %76 = vmatmul.f32.gmra.mxu0 %v75
    %v77 = vpop.f32.mrf.mxu0
    %v78 = vadd.f32 0.0, %v77
    %v79 = vand.u32 %v42, 4294901760
    %v80 = vsub.f32 %v42, %v79
    %v81 = vand.u32 %v80, 4294901760
    %v82 = vsub.f32 %v80, %v81
    %v83 = vand.u32 %v82, 4294901760
    %84 = vmatmul.f32.gmra.mxu0 %v83
    %v85 = vpop.f32.mrf.mxu0
    %v86 = vadd.f32 0.0, %v85
    %87 = vdwg.mxu0
    %88 = vmatpush.msra.mxu0 0.0
    %89 = vmatpush.msra.mxu0 0.0
    %90 = vmatpush.msra.mxu0 0.0
    %91 = vmatpush.msra.mxu0 0.0
    %92 = vmatpush.msra.mxu0 0.0
    %93 = vmatpush.msra.mxu0 0.0
    %94 = vmatpush.msra.mxu0 0.0
    %95 = vmatpush.msra.mxu0 0.0
    %96 = vmatpush.msra.mxu0 0.0
    %v97 = vand.u32 %v46, 4294901760
    %v98 = vsub.f32 %v46, %v97
    %v99 = vand.u32 %v98, 4294901760
    %v100 = vsub.f32 %v98, %v99
    %v101 = vand.u32 %v100, 4294901760
    %102 = vmatpush.msra.mxu0 %v101
    %v103 = vand.u32 %v35, 4294901760
    %v104 = vsub.f32 %v35, %v103
    %v105 = vand.u32 %v104, 4294901760
    %v106 = vsub.f32 %v104, %v105
    %v107 = vand.u32 %v106, 4294901760
    %108 = vmatpush.msra.mxu0 %v107
    %v109 = vand.u32 %v34, 4294901760
    %v110 = vsub.f32 %v34, %v109
    %v111 = vand.u32 %v110, 4294901760
    %v112 = vsub.f32 %v110, %v111
    %v113 = vand.u32 %v112, 4294901760
    %114 = vmatpush.msra.mxu0 %v113
    %v115 = vand.u32 %v33, 4294901760
    %v116 = vsub.f32 %v33, %v115
    %v117 = vand.u32 %v116, 4294901760
    %v118 = vsub.f32 %v116, %v117
    %v119 = vand.u32 %v118, 4294901760
    %120 = vmatpush.msra.mxu0 %v119
    %v121 = vand.u32 %v32, 4294901760
    %v122 = vsub.f32 %v32, %v121
    %v123 = vand.u32 %v122, 4294901760
    %v124 = vsub.f32 %v122, %v123
    %v125 = vand.u32 %v124, 4294901760
    %126 = vmatpush.msra.mxu0 %v125
    %v127 = vand.u32 %v31, 4294901760
    %v128 = vsub.f32 %v31, %v127
    %v129 = vand.u32 %v128, 4294901760
    %v130 = vsub.f32 %v128, %v129
    %v131 = vand.u32 %v130, 4294901760
    %132 = vmatpush.msra.mxu0 %v131
    %v133 = vand.u32 %v30, 4294901760
    %v134 = vsub.f32 %v30, %v133
    %v135 = vand.u32 %v134, 4294901760
    %v136 = vsub.f32 %v134, %v135
    %v137 = vand.u32 %v136, 4294901760
    %138 = vmatpush.msra.mxu0 %v137
    %v139 = vand.u32 %v39, 4294901760
    %140 = vmatmul.f32.gmra.mxu0 %v139
    %v141 = vpop.f32.mrf.mxu0
    %v142 = vadd.f32 %v78, %v141
    %v143 = vand.u32 %v42, 4294901760
    %144 = vmatmul.f32.gmra.mxu0 %v143
    %v145 = vpop.f32.mrf.mxu0
    %v146 = vadd.f32 %v86, %v145
    %147 = vdwg.mxu0
    %148 = vmatpush.msra.mxu0 0.0
    %149 = vmatpush.msra.mxu0 0.0
    %150 = vmatpush.msra.mxu0 0.0
    %151 = vmatpush.msra.mxu0 0.0
    %152 = vmatpush.msra.mxu0 0.0
    %153 = vmatpush.msra.mxu0 0.0
    %154 = vmatpush.msra.mxu0 0.0
    %155 = vmatpush.msra.mxu0 0.0
    %156 = vmatpush.msra.mxu0 0.0
    %v157 = vand.u32 %v46, 4294901760
    %v158 = vsub.f32 %v46, %v157
    %159 = vmatpush.msra.mxu0 %v158
    %v160 = vand.u32 %v35, 4294901760
    %v161 = vsub.f32 %v35, %v160
    %162 = vmatpush.msra.mxu0 %v161
    %v163 = vand.u32 %v34, 4294901760
    %v164 = vsub.f32 %v34, %v163
    %165 = vmatpush.msra.mxu0 %v164
    %v166 = vand.u32 %v33, 4294901760
    %v167 = vsub.f32 %v33, %v166
    %168 = vmatpush.msra.mxu0 %v167
    %v169 = vand.u32 %v32, 4294901760
    %v170 = vsub.f32 %v32, %v169
    %171 = vmatpush.msra.mxu0 %v170
    %v172 = vand.u32 %v31, 4294901760
    %v173 = vsub.f32 %v31, %v172
    %174 = vmatpush.msra.mxu0 %v173
    %v175 = vand.u32 %v30, 4294901760
    %v176 = vsub.f32 %v30, %v175
    %177 = vmatpush.msra.mxu0 %v176
    %v178 = vand.u32 %v39, 4294901760
    %v179 = vsub.f32 %v39, %v178
    %180 = vmatmul.f32.gmra.mxu0 %v179
    %v181 = vpop.f32.mrf.mxu0
    %v182 = vadd.f32 %v142, %v181
    %v183 = vand.u32 %v42, 4294901760
    %v184 = vsub.f32 %v42, %v183
    %185 = vmatmul.f32.gmra.mxu0 %v184
    %v186 = vpop.f32.mrf.mxu0
    %v187 = vadd.f32 %v146, %v186
    %188 = vdwg.mxu0
    %189 = vmatpush.msra.mxu0 0.0
    %190 = vmatpush.msra.mxu0 0.0
    %191 = vmatpush.msra.mxu0 0.0
    %192 = vmatpush.msra.mxu0 0.0
    %193 = vmatpush.msra.mxu0 0.0
    %194 = vmatpush.msra.mxu0 0.0
    %195 = vmatpush.msra.mxu0 0.0
    %196 = vmatpush.msra.mxu0 0.0
    %197 = vmatpush.msra.mxu0 0.0
    %v198 = vand.u32 %v46, 4294901760
    %199 = vmatpush.msra.mxu0 %v198
    %v200 = vand.u32 %v35, 4294901760
    %201 = vmatpush.msra.mxu0 %v200
    %v202 = vand.u32 %v34, 4294901760
    %203 = vmatpush.msra.mxu0 %v202
    %v204 = vand.u32 %v33, 4294901760
    %205 = vmatpush.msra.mxu0 %v204
    %v206 = vand.u32 %v32, 4294901760
    %207 = vmatpush.msra.mxu0 %v206
    %v208 = vand.u32 %v31, 4294901760
    %209 = vmatpush.msra.mxu0 %v208
    %v210 = vand.u32 %v30, 4294901760
    %211 = vmatpush.msra.mxu0 %v210
    %v212 = vand.u32 %v39, 4294901760
    %v213 = vsub.f32 %v39, %v212
    %v214 = vand.u32 %v213, 4294901760
    %215 = vmatmul.f32.gmra.mxu0 %v214
    %v216 = vpop.f32.mrf.mxu0
    %v217 = vadd.f32 %v182, %v216
    %v218 = vand.u32 %v42, 4294901760
    %v219 = vsub.f32 %v42, %v218
    %v220 = vand.u32 %v219, 4294901760
    %221 = vmatmul.f32.gmra.mxu0 %v220
    %v222 = vpop.f32.mrf.mxu0
    %v223 = vadd.f32 %v187, %v222
    %224 = vdwg.mxu0
    %225 = vmatpush.msra.mxu0 0.0
    %226 = vmatpush.msra.mxu0 0.0
    %227 = vmatpush.msra.mxu0 0.0
    %228 = vmatpush.msra.mxu0 0.0
    %229 = vmatpush.msra.mxu0 0.0
    %230 = vmatpush.msra.mxu0 0.0
    %231 = vmatpush.msra.mxu0 0.0
    %232 = vmatpush.msra.mxu0 0.0
    %233 = vmatpush.msra.mxu0 0.0
    %v234 = vand.u32 %v46, 4294901760
    %v235 = vsub.f32 %v46, %v234
    %v236 = vand.u32 %v235, 4294901760
    %237 = vmatpush.msra.mxu0 %v236
    %v238 = vand.u32 %v35, 4294901760
    %v239 = vsub.f32 %v35, %v238
    %v240 = vand.u32 %v239, 4294901760
    %241 = vmatpush.msra.mxu0 %v240
    %v242 = vand.u32 %v34, 4294901760
    %v243 = vsub.f32 %v34, %v242
    %v244 = vand.u32 %v243, 4294901760
    %245 = vmatpush.msra.mxu0 %v244
    %v246 = vand.u32 %v33, 4294901760
    %v247 = vsub.f32 %v33, %v246
    %v248 = vand.u32 %v247, 4294901760
    %249 = vmatpush.msra.mxu0 %v248
    %v250 = vand.u32 %v32, 4294901760
    %v251 = vsub.f32 %v32, %v250
    %v252 = vand.u32 %v251, 4294901760
    %253 = vmatpush.msra.mxu0 %v252
    %v254 = vand.u32 %v31, 4294901760
    %v255 = vsub.f32 %v31, %v254
    %v256 = vand.u32 %v255, 4294901760
    %257 = vmatpush.msra.mxu0 %v256
    %v258 = vand.u32 %v30, 4294901760
    %v259 = vsub.f32 %v30, %v258
    %v260 = vand.u32 %v259, 4294901760
    %261 = vmatpush.msra.mxu0 %v260
    %v262 = vand.u32 %v39, 4294901760
    %263 = vmatmul.f32.gmra.mxu0 %v262
    %v264 = vpop.f32.mrf.mxu0
    %v265 = vadd.f32 %v217, %v264
    %v266 = vand.u32 %v42, 4294901760
    %267 = vmatmul.f32.gmra.mxu0 %v266
    %v268 = vpop.f32.mrf.mxu0
    %v269 = vadd.f32 %v223, %v268
    %270 = vdwg.mxu0
    %271 = vmatpush.msra.mxu0 0.0
    %272 = vmatpush.msra.mxu0 0.0
    %273 = vmatpush.msra.mxu0 0.0
    %274 = vmatpush.msra.mxu0 0.0
    %275 = vmatpush.msra.mxu0 0.0
    %276 = vmatpush.msra.mxu0 0.0
    %277 = vmatpush.msra.mxu0 0.0
    %278 = vmatpush.msra.mxu0 0.0
    %279 = vmatpush.msra.mxu0 0.0
    %v280 = vand.u32 %v46, 4294901760
    %281 = vmatpush.msra.mxu0 %v280
    %v282 = vand.u32 %v35, 4294901760
    %283 = vmatpush.msra.mxu0 %v282
    %v284 = vand.u32 %v34, 4294901760
    %285 = vmatpush.msra.mxu0 %v284
    %v286 = vand.u32 %v33, 4294901760
    %287 = vmatpush.msra.mxu0 %v286
    %v288 = vand.u32 %v32, 4294901760
    %289 = vmatpush.msra.mxu0 %v288
    %v290 = vand.u32 %v31, 4294901760
    %291 = vmatpush.msra.mxu0 %v290
    %v292 = vand.u32 %v30, 4294901760
    %293 = vmatpush.msra.mxu0 %v292
    %v294 = vand.u32 %v39, 4294901760
    %295 = vmatmul.f32.gmra.mxu0 %v294
    %v296 = vpop.f32.mrf.mxu0
    %v297 = vadd.f32 %v265, %v296
    %v298 = vand.u32 %v42, 4294901760
    %299 = vmatmul.f32.gmra.mxu0 %v298
    %v300 = vpop.f32.mrf.mxu0
    %v301 = vadd.f32 %v269, %v300
    %302 = vdwg.mxu0
    %vm303 = vcmask 261120
    %304 = vst.msk [vmem:[#allocation4] sm:$0xff] %vm303, %v297
    %305 = vst.msk [vmem:[#allocation4 + $0x8] sm:$0xff] %vm303, %v301
    // Predicated region
    $region10: #{tpu_custom_call.1} parent=1 // pred_check
      _
    $region11: #{tpu_custom_call.1} parent=1 // pred_check_branch
      %307 = sbr.rel (0) target = $region13
    $region12: #{tpu_custom_call.1} parent=1 // pred_region
      %309 = vsyncadd [#allocation5], 0
      %s310 = sshll.u32 [#allocation4], 4
      %s311 = int_to_ptr.vmem [resolvable:$true] %s310
      %s312 = sshll.u32 %s3, 4
      %s313 = int_to_ptr.hbm [resolvable:$true] %s312
      %318 = dma.vmem_to_hbm [thread:$0]  %s311, 256, %s313, [#allocation5], 128, 128, 8
    $region13: #{tpu_custom_call.1} parent=1 // pred_fallthru
      _
    // Predicated region
    $region14: #{tpu_custom_call.1} parent=1 // pred_check
      _
    $region15: #{tpu_custom_call.1} parent=1 // pred_check_branch
      %320 = sbr.rel (0) target = $region17
    $region16: #{tpu_custom_call.1} parent=1 // pred_region
      %322 = dma.done [#allocation5], 256
    $region17: #{tpu_custom_call.1} parent=1 // pred_fallthru
      _
    %323 = vsyncpa [#allocation5], 1

</llo_original>
